<compile_context>
chip_gen: v5e
topology: v5e:2x2
jax: 0.10.0
libtpu: 0.0.40
codegen_flags: <defaults>
</compile_context>

<pallas_src>
import functools

import jax
import jax.numpy as jnp
from jax import lax
from jax.experimental import pallas as pl
from jax.experimental.pallas import tpu as pltpu


# Cross-generation safe defaults (v5e/v6e/v7x); tiles clamp to full extent for
# small shapes.  v6e can push Q_TILE/KV_TILE to 512; re-derive the VMEM budget
# before doing the same on v7x (64 MiB physical / 32 MiB scoped default).
Q_TILE = 256
KV_TILE = 256
M_TILE = 256
N_TILE = 512
K_TILE = 512


def _sublane_multiple(dtype):
    """Required second-to-last block-dim alignment for packed dtypes."""
    return max(8, 32 // jnp.dtype(dtype).itemsize)   # f32:8, bf16:16, int8:32


def _pick_tile(dim, target, dtype, *, lane=False):
    """Largest MXU-friendly tile <= target that divides dim, else full dim.

    Preference: multiples of 256, then 128, then (sublane dims only) the dtype
    sublane multiple.  Lane dims must be 128-aligned or full extent.
    """
    if dim <= target:
        return dim
    mults = (256, 128) if lane else (256, 128, _sublane_multiple(dtype))
    for mult in mults:
        t = (target // mult) * mult
        while t >= mult:
            if dim % t == 0:
                return t
            t -= mult
    return dim  # full-extent block is always legal


def _heads_per_step(num_heads, head_dim):
    """Heads fused per grid step: smallest g | H with (g*Dh) % 128 == 0."""
    if head_dim % 128 == 0:
        return 1
    for g in range(1, num_heads + 1):
        if num_heads % g == 0 and (g * head_dim) % 128 == 0:
            return g
    return num_heads  # fall back to all heads (full-extent last dim)


# ---------------------------------------------------------------------------
# Tiled linear projection (no bias): grid = (M//tm, N//tn, K//tk),
# f32 VMEM accumulator, K is the reduction (last / "arbitrary") axis.
# ---------------------------------------------------------------------------
def _matmul_kernel(x_ref, w_ref, o_ref, acc_ref):
    @pl.when(pl.program_id(2) == 0)
    def _init():
        acc_ref[...] = jnp.zeros_like(acc_ref)

    acc_ref[...] += jnp.dot(x_ref[...], w_ref[...],
                            preferred_element_type=jnp.float32)

    @pl.when(pl.program_id(2) == pl.num_programs(2) - 1)
    def _store():
        o_ref[...] = acc_ref[...].astype(o_ref.dtype)


def linear_nobias(x, w, *, m_tile=M_TILE, n_tile=N_TILE, k_tile=K_TILE):
    M, K = x.shape
    K2, N = w.shape
    assert K == K2
    tm = _pick_tile(M, m_tile, x.dtype)
    tn = _pick_tile(N, n_tile, w.dtype, lane=True)
    tk = _pick_tile(K, k_tile, x.dtype, lane=True)
    return pl.pallas_call(
        _matmul_kernel,
        out_shape=jax.ShapeDtypeStruct((M, N), x.dtype),
        grid_spec=pltpu.PrefetchScalarGridSpec(
            num_scalar_prefetch=0,
            grid=(M // tm, N // tn, K // tk),
            in_specs=[
                pl.BlockSpec((tm, tk), lambda i, j, k: (i, k)),
                pl.BlockSpec((tk, tn), lambda i, j, k: (k, j)),
            ],
            out_specs=pl.BlockSpec((tm, tn), lambda i, j, k: (i, j)),
            scratch_shapes=[pltpu.VMEM((tm, tn), jnp.float32)],
        ),
        compiler_params=pltpu.CompilerParams(
            dimension_semantics=("parallel", "parallel", "arbitrary"),
        ),
    )(x, w)


# ---------------------------------------------------------------------------
# Flash attention (online softmax), head axis handled by BlockSpec index_maps.
# q/k/v arrays are (B, S, >= H*Dh) with the heads packed along the last dim
# (optionally together with K/V in one fused QKV array via head offsets).
# grid = (B, H//G, Sq//tq, Sk//tk); KV is the reduction axis.
# ---------------------------------------------------------------------------
def _flash_attention_kernel(q_ref, k_ref, v_ref, o_ref, m_sc, l_sc, acc_sc,
                            *, G, Dh):
    ki = pl.program_id(3)

    @pl.when(ki == 0)
    def _init():
        m_sc[...] = jnp.full_like(m_sc, -jnp.inf)
        l_sc[...] = jnp.zeros_like(l_sc)
        acc_sc[...] = jnp.zeros_like(acc_sc)

    q = q_ref[...]            # (tq, G*Dh), native dtype (scale folded into W_q)
    k = k_ref[...]            # (tk, G*Dh)
    v = v_ref[...]            # (tk, G*Dh)

    # Static per-head loop: G is small (G*Dh ~ 128 lanes), matmuls stay 2-D.
    for g in range(G):
        lo = g * Dh
        qg = q[:, lo:lo + Dh]
        kg = k[:, lo:lo + Dh]
        vg = v[:, lo:lo + Dh]

        # s[q, k] = sum_d qg[q, d] * kg[k, d]  (contract last dims, no transpose)
        s = lax.dot_general(qg, kg,
                            dimension_numbers=(((1,), (1,)), ((), ())),
                            preferred_element_type=jnp.float32)    # (tq, tk) f32

        m_prev = m_sc[g]                                           # (tq, 1)
        m_new = jnp.maximum(m_prev, jnp.max(s, axis=-1, keepdims=True))
        alpha = jnp.exp(m_prev - m_new)
        p = jnp.exp(s - m_new)                                     # (tq, tk) f32

        l_sc[g] = alpha * l_sc[g] + jnp.sum(p, axis=-1, keepdims=True)
        acc_sc[g] = alpha * acc_sc[g] + jnp.dot(
            p.astype(vg.dtype), vg, preferred_element_type=jnp.float32)
        m_sc[g] = m_new

    @pl.when(ki == pl.num_programs(3) - 1)
    def _finalize():
        for g in range(G):
            lo = g * Dh
            inv_l = pl.reciprocal(l_sc[g], approx=True)
            o_ref[:, lo:lo + Dh] = (acc_sc[g] * inv_l).astype(o_ref.dtype)


def flash_attention(q_arr, k_arr, v_arr, *, num_heads, head_dim,
                    heads_per_step, head_offsets,
                    q_tile=Q_TILE, kv_tile=KV_TILE):
    H, Dh, G = num_heads, head_dim, heads_per_step
    assert H % G == 0
    B, Sq = q_arr.shape[0], q_arr.shape[1]
    Sk = k_arr.shape[1]
    nh = H * Dh
    q_off, k_off, v_off = head_offsets      # in units of (G*Dh)-wide blocks

    tq = _pick_tile(Sq, q_tile, q_arr.dtype)
    tk = _pick_tile(Sk, kv_tile, k_arr.dtype)
    grid = (B, H // G, Sq // tq, Sk // tk)

    kernel = functools.partial(_flash_attention_kernel, G=G, Dh=Dh)

    return pl.pallas_call(
        kernel,
        out_shape=jax.ShapeDtypeStruct((B, Sq, nh), q_arr.dtype),
        grid_spec=pltpu.PrefetchScalarGridSpec(
            num_scalar_prefetch=0,
            grid=grid,
            in_specs=[
                # Leading batch dim squeezed -> kernel sees 2-D tiles; the head
                # group (and the Q/K/V offset in the fused-QKV case) is picked
                # by the last-dim block index -> no wrapper transposes.
                pl.BlockSpec((None, tq, G * Dh),
                             lambda b, hg, qi, ki: (b, qi, hg + q_off)),
                pl.BlockSpec((None, tk, G * Dh),
                             lambda b, hg, qi, ki: (b, ki, hg + k_off)),
                pl.BlockSpec((None, tk, G * Dh),
                             lambda b, hg, qi, ki: (b, ki, hg + v_off)),
            ],
            # Output block ignores ki -> resident across the KV reduction axis;
            # written straight into the (B, Sq, H*Dh) context layout.
            out_specs=pl.BlockSpec((None, tq, G * Dh),
                                   lambda b, hg, qi, ki: (b, qi, hg)),
            scratch_shapes=[
                pltpu.VMEM((G, tq, 1), jnp.float32),    # running max m
                pltpu.VMEM((G, tq, 1), jnp.float32),    # running sum l
                pltpu.VMEM((G, tq, Dh), jnp.float32),   # f32 accumulator
            ],
        ),
        compiler_params=pltpu.CompilerParams(
            dimension_semantics=("parallel", "parallel", "parallel", "arbitrary"),
        ),
    )(q_arr, k_arr, v_arr)


# ---------------------------------------------------------------------------
# Full MultiHeadAttention forward (mask=None path, dropout == identity).
# ---------------------------------------------------------------------------
def multi_head_attention(queries, keys, values, params, num_heads,
                         mask=None, dropout_rate=0.0):
    assert mask is None, "only the mask=None path is implemented"
    del dropout_rate  # dropout == identity (eval mode / p = 0)

    W_q, W_k, W_v, W_o = params
    B, Sq, _ = queries.shape
    _, Sk, _ = keys.shape
    H = num_heads
    nh = W_q.shape[1]
    Dh = nh // H
    assert Dh * H == nh

    G = _heads_per_step(H, Dh)
    # Fold 1/sqrt(Dh) into W_q once (ideally done at parameter prep time).
    scale = 1.0 / (float(Dh) ** 0.5)
    W_q_scaled = (W_q * scale).astype(W_q.dtype)

    self_attn = (queries is keys) and (keys is values)
    fused_ok = (self_attn and (G * Dh) % 128 == 0
                and W_q.shape[0] == W_k.shape[0] == W_v.shape[0])

    if fused_ok:
        # One pass over the activation: x @ [W_q*s | W_k | W_v]; the attention
        # kernel slices q/k/v out of the packed array via head-block offsets.
        W_qkv = jnp.concatenate([W_q_scaled, W_k, W_v], axis=1)   # (in, 3*nh)
        qkv = linear_nobias(queries.reshape(B * Sq, -1), W_qkv)
        qkv = qkv.reshape(B, Sq, 3 * nh)
        q_arr = k_arr = v_arr = qkv
        blocks_per_tensor = nh // (G * Dh)                        # == H // G
        offsets = (0, blocks_per_tensor, 2 * blocks_per_tensor)
    else:
        q_arr = linear_nobias(queries.reshape(B * Sq, -1), W_q_scaled).reshape(B, Sq, nh)
        k_arr = linear_nobias(keys.reshape(B * Sk, -1), W_k).reshape(B, Sk, nh)
        v_arr = linear_nobias(values.reshape(B * Sk, -1), W_v).reshape(B, Sk, nh)
        offsets = (0, 0, 0)

    # Context comes back already in (B, Sq, H*Dh) layout -> feed W_o directly.
    ctx = flash_attention(q_arr, k_arr, v_arr, num_heads=H, head_dim=Dh,
                          heads_per_step=G, head_offsets=offsets)
    out = linear_nobias(ctx.reshape(B * Sq, nh), W_o)
    return out.reshape(B, Sq, nh)


# ---------------------------------------------------------------------------
# Pure-JAX reference for correctness checking.
# ---------------------------------------------------------------------------
def _reference_mha(queries, keys, values, params, num_heads):
    W_q, W_k, W_v, W_o = params
    q = queries @ W_q
    k = keys @ W_k
    v = values @ W_v
    B, Sq, nh = q.shape
    Sk = k.shape[1]
    H = num_heads
    Dh = nh // H

    def split(x, S):
        return x.reshape(B, S, H, Dh).transpose(0, 2, 1, 3).reshape(B * H, S, Dh)

    qh, kh, vh = split(q, Sq), split(k, Sk), split(v, Sk)
    score = jnp.einsum("bqd,bkd->bqk", qh, kh) / jnp.sqrt(jnp.float32(Dh))
    attn = jax.nn.softmax(score, axis=-1)
    ctx = jnp.einsum("bqk,bkd->bqd", attn, vh)
    ctx = ctx.reshape(B, H, Sq, Dh).transpose(0, 2, 1, 3).reshape(B, Sq, nh)
    return ctx @ W_o


if __name__ == "__main__":
    root = jax.random.PRNGKey(0)

    def make_params(key, qs, ks, vs, nh):
        kwq, kwk, kwv, kwo = jax.random.split(key, 4)
        s = 1.0 / (nh ** 0.5)
        return (jax.random.normal(kwq, (qs, nh), jnp.float32) * s,
                jax.random.normal(kwk, (ks, nh), jnp.float32) * s,
                jax.random.normal(kwv, (vs, nh), jnp.float32) * s,
                jax.random.normal(kwo, (nh, nh), jnp.float32) * s)

    # --- Test 1: distinct q/k/v inputs, tiny heads (Dh=8) -> grouped-head path.
    B, Sq, Sk = 2, 8, 8
    query_size = key_size = value_size = 32
    num_hiddens, num_heads = 32, 4
    k_in, k_par, root = jax.random.split(root, 3)
    kq, kk, kv = jax.random.split(k_in, 3)
    queries = jax.random.normal(kq, (B, Sq, query_size), jnp.float32)
    keys = jax.random.normal(kk, (B, Sk, key_size), jnp.float32)
    values = jax.random.normal(kv, (B, Sk, value_size), jnp.float32)
    params = make_params(k_par, query_size, key_size, value_size, num_hiddens)

    out = multi_head_attention(queries, keys, values, params, num_heads, mask=None)
    out = jax.block_until_ready(out)
    ref = _reference_mha(queries, keys, values, params, num_heads)
    assert out.shape == (B, Sq, num_hiddens)
    assert jnp.allclose(out, ref, atol=1e-2, rtol=1e-2), "mismatch (cross-attn path)"

    # --- Test 2: self-attention (q is k is v), Dh=128 -> fused packed-QKV path.
    B2, S2, nh2, H2 = 2, 8, 256, 2
    k_in2, k_par2 = jax.random.split(root, 2)
    x = jax.random.normal(k_in2, (B2, S2, nh2), jnp.float32)
    params2 = make_params(k_par2, nh2, nh2, nh2, nh2)
    out2 = multi_head_attention(x, x, x, params2, H2, mask=None)
    out2 = jax.block_until_ready(out2)
    ref2 = _reference_mha(x, x, x, params2, H2)
    assert out2.shape == (B2, S2, nh2)
    assert jnp.allclose(out2, ref2, atol=1e-2, rtol=1e-2), "mismatch (fused QKV path)"

    print("KERNEL_OK")
</pallas_src>

<mosaic_0001>
module attributes {stable_mosaic.version = 11 : i64} {
  func.func @_matmul_kernel(%arg0: i32, %arg1: i32, %arg2: i32, %arg3: memref<16x32xf32, #tpu.memory_space<vmem>>, %arg4: memref<32x32xf32, #tpu.memory_space<vmem>>, %arg5: memref<16x32xf32, #tpu.memory_space<vmem>>, %arg6: memref<16x32xf32, #tpu.memory_space<vmem>>) attributes {dimension_semantics = [#tpu.dimension_semantics<parallel>, #tpu.dimension_semantics<parallel>, #tpu.dimension_semantics<arbitrary>], iteration_bounds = array<i64: 1, 1, 1>, scalar_prefetch = 0 : i64, scratch_operands = 1 : i64, tpu.core_type = #tpu.core_type<tc>, window_params = [{transform_indices = @transform_0, window_bounds = array<i64: 16, 32>}, {transform_indices = @transform_1, window_bounds = array<i64: 32, 32>}, {transform_indices = @transform_2, window_bounds = array<i64: 16, 32>}]} {
    %c0_i32 = arith.constant 0 : i32
    %0 = arith.cmpi eq, %arg2, %c0_i32 : i32
    %1 = arith.extui %0 : i1 to i32
    %c0_i32_0 = arith.constant 0 : i32
    %2 = arith.cmpi ne, %1, %c0_i32_0 : i32
    scf.if %2 {
      %cst_10 = arith.constant 0.000000e+00 : f32
      %12 = vector.broadcast %cst_10 : f32 to vector<16x32xf32>
      %c0_11 = arith.constant 0 : index
      %c0_12 = arith.constant 0 : index
      %13 = vector.load %arg6[%c0_11, %c0_12] : memref<16x32xf32, #tpu.memory_space<vmem>>, vector<16x32xf32>
      tpu.vector_store %arg6[%c0_11, %c0_12], %12 {strides = array<i32>} : memref<16x32xf32, #tpu.memory_space<vmem>>, vector<16x32xf32>,
    } else {
    }
    %c0 = arith.constant 0 : index
    %c0_1 = arith.constant 0 : index
    %3 = vector.load %arg6[%c0, %c0_1] : memref<16x32xf32, #tpu.memory_space<vmem>>, vector<16x32xf32>
    %c0_2 = arith.constant 0 : index
    %c0_3 = arith.constant 0 : index
    %4 = vector.load %arg3[%c0_2, %c0_3] : memref<16x32xf32, #tpu.memory_space<vmem>>, vector<16x32xf32>
    %c0_4 = arith.constant 0 : index
    %c0_5 = arith.constant 0 : index
    %5 = vector.load %arg4[%c0_4, %c0_5] : memref<32x32xf32, #tpu.memory_space<vmem>>, vector<32x32xf32>
    %cst = arith.constant dense<0.000000e+00> : vector<16x32xf32>
    %6 = tpu.matmul %4, %5, %cst {dimension_numbers = #tpu.dot_dimension_numbers<[1], [0], [0], [1], [0, 0, 1, 1], [], []>} : vector<16x32xf32>, vector<32x32xf32>, vector<16x32xf32> -> vector<16x32xf32>
    %7 = arith.addf %3, %6 : vector<16x32xf32>
    %c0_6 = arith.constant 0 : index
    %c0_7 = arith.constant 0 : index
    %8 = vector.load %arg6[%c0_6, %c0_7] : memref<16x32xf32, #tpu.memory_space<vmem>>, vector<16x32xf32>
    tpu.vector_store %arg6[%c0_6, %c0_7], %7 {strides = array<i32>} : memref<16x32xf32, #tpu.memory_space<vmem>>, vector<16x32xf32>,
    %c0_i32_8 = arith.constant 0 : i32
    %9 = arith.cmpi eq, %arg2, %c0_i32_8 : i32
    %10 = arith.extui %9 : i1 to i32
    %c0_i32_9 = arith.constant 0 : i32
    %11 = arith.cmpi ne, %10, %c0_i32_9 : i32
    scf.if %11 {
      %c0_10 = arith.constant 0 : index
      %c0_11 = arith.constant 0 : index
      %12 = vector.load %arg6[%c0_10, %c0_11] : memref<16x32xf32, #tpu.memory_space<vmem>>, vector<16x32xf32>
      %c0_12 = arith.constant 0 : index
      %c0_13 = arith.constant 0 : index
      %13 = vector.load %arg5[%c0_12, %c0_13] : memref<16x32xf32, #tpu.memory_space<vmem>>, vector<16x32xf32>
      tpu.vector_store %arg5[%c0_12, %c0_13], %12 {strides = array<i32>} : memref<16x32xf32, #tpu.memory_space<vmem>>, vector<16x32xf32>,
    } else {
    }
    return
  }
  func.func @transform_0(%arg0: i32, %arg1: i32, %arg2: i32) -> (i32, i32) {
    %c0_i32 = arith.constant 0 : i32
    return %arg0, %arg2 : i32, i32
  }
  func.func @transform_1(%arg0: i32, %arg1: i32, %arg2: i32) -> (i32, i32) {
    %c0_i32 = arith.constant 0 : i32
    return %arg2, %arg1 : i32, i32
  }
  func.func @transform_2(%arg0: i32, %arg1: i32, %arg2: i32) -> (i32, i32) {
    %c0_i32 = arith.constant 0 : i32
    return %arg0, %arg1 : i32, i32
  }
}

</mosaic_0001>

<llo_original>
// kernel: tpu_custom_call.1
$region0: #{tpu_custom_call.1}
  #allocation0 [shape = 'u32[]', space=smem, size = 0x4, offset = 0x4, fixed_abs, tag = 'smem constant byte address 0x4 - core index']
  #allocation1 [shape = 'u32[72,128]{1,0:T(1,128)}', space=vmem, size = 0x9000, scoped, tag = 'internal scratch']
  #allocation2 [shape = 'f32[16,32]{1,0:T(8,128)}', space=vmem, size = 0x2000, scoped, tag = 'scratch operand']
  %s0 = inlined_call_operand.hbm [shape: f32[16,32], index: 0, kind: input, shape index: {}]
  %s1 = inlined_call_operand.hbm [shape: f32[32,32], index: 1, kind: input, shape index: {}]
  %s2 = inlined_call_operand.hbm [shape: f32[16,32], index: 2, kind: output, shape index: {}]
  %s3 = sld [smem:[#allocation0]]
  $region34: #{tpu_custom_call.1} parent=0
    _
  %s5 = ssub.s32 1, %s3
  %s6 = scalar_select 0, %s5, %s3
  $region1: #{tpu_custom_call.1} parent=0
    #allocation3 [shape = 'u8[8192]{0}', space=vmem, size = 0x2000, scoped, tag = 'input window, operand 0, single buffered']
    #allocation4 [shape = 's32[1]{0}', space=sflag, size = 0x4, scoped, tag = 'scoped memory for tpu_custom_call.1']
    #allocation5 [shape = 's32[1]{0}', space=sflag, size = 0x4, scoped, tag = 'scoped memory for tpu_custom_call.1']
    #allocation6 [shape = 'u8[16384]{0}', space=vmem, size = 0x4000, scoped, tag = 'input window, operand 1, single buffered']
    #allocation7 [shape = 's32[1]{0}', space=sflag, size = 0x4, scoped, tag = 'scoped memory for tpu_custom_call.1']
    #allocation8 [shape = 'u8[8192]{0}', space=vmem, size = 0x2000, scoped, tag = 'output window, operand 0, single buffered']
    %7 = vsyncpa [#allocation4], 0
    %8 = vsyncpa [#allocation7], 0
    %9 = vsyncpa [#allocation5], 0
    // Predicated region
    $region2: #{tpu_custom_call.1} parent=1 // pred_check
      _
    $region3: #{tpu_custom_call.1} parent=1 // pred_check_branch
      %11 = sbr.rel (0) target = $region5
    $region4: #{tpu_custom_call.1} parent=1 // pred_region
      %13 = vsyncadd [#allocation4], 0
      %s14 = sshll.u32 %s0, 4
      %s15 = int_to_ptr.hbm [resolvable:$true] %s14
      %s16 = sshll.u32 [#allocation3], 4
      %s17 = int_to_ptr.vmem [resolvable:$true] %s16
      %22 = dma.hbm_to_vmem [thread:$0]  %s15, 256, %s17, [#allocation4], 128, 128, 8
    $region5: #{tpu_custom_call.1} parent=1 // pred_fallthru
      _
    // Predicated region
    $region6: #{tpu_custom_call.1} parent=1 // pred_check
      _
    $region7: #{tpu_custom_call.1} parent=1 // pred_check_branch
      %24 = sbr.rel (0) target = $region9
    $region8: #{tpu_custom_call.1} parent=1 // pred_region
      %26 = vsyncadd [#allocation7], 0
      %s27 = sshll.u32 %s1, 4
      %s28 = int_to_ptr.hbm [resolvable:$true] %s27
      %s29 = sshll.u32 [#allocation6], 4
      %s30 = int_to_ptr.vmem [resolvable:$true] %s29
      %35 = dma.hbm_to_vmem [thread:$0]  %s28, 512, %s30, [#allocation7], 128, 128, 8
    $region9: #{tpu_custom_call.1} parent=1 // pred_fallthru
      _
    // Predicated region
    $region10: #{tpu_custom_call.1} parent=1 // pred_check
      _
    $region11: #{tpu_custom_call.1} parent=1 // pred_check_branch
      %37 = sbr.rel (0) target = $region13
    $region12: #{tpu_custom_call.1} parent=1 // pred_region
      %39 = dma.done [#allocation4], 256
    $region13: #{tpu_custom_call.1} parent=1 // pred_fallthru
      _
    // Predicated region
    $region14: #{tpu_custom_call.1} parent=1 // pred_check
      _
    $region15: #{tpu_custom_call.1} parent=1 // pred_check_branch
      %41 = sbr.rel (0) target = $region17
    $region16: #{tpu_custom_call.1} parent=1 // pred_region
      %43 = dma.done [#allocation7], 512
    $region17: #{tpu_custom_call.1} parent=1 // pred_fallthru
      _
    %p44 = scmp.eq.s32.totalorder 0, 0
    // Predicated region
    $region18: #{tpu_custom_call.1} parent=1 // pred_check
      %p45 = pneg %p44
    $region19: #{tpu_custom_call.1} parent=1 // pred_check_branch
      %47 = sbr.rel (%p45) target = $region21
    $region20: #{tpu_custom_call.1} parent=1 // pred_region
      %vm48 = vcmask 261120
      %49 = vst.msk [vmem:[#allocation2] sm:$0xff] %vm48, 0.0
      %50 = vst.msk [vmem:[#allocation2 + $0x8] sm:$0xff] %vm48, 0.0
    $region21: #{tpu_custom_call.1} parent=1 // pred_fallthru
      _
    %v51 = vld [vmem:[#allocation2] sm:$0xff]
    %v52 = vld [vmem:[#allocation2 + $0x8] sm:$0xff]
    %v53 = vld [vmem:[#allocation3] sm:$0xff]
    %v54 = vld [vmem:[#allocation3 + $0x8] sm:$0xff]
    %v55 = vld [vmem:[#allocation6] sm:$0xff]
    %v56 = vld [vmem:[#allocation6 + $0x8] sm:$0xff]
    %v57 = vld [vmem:[#allocation6 + $0x10] sm:$0xff]
    %v58 = vld [vmem:[#allocation6 + $0x18] sm:$0xff]
    %vm59 = vcmask 261120
    %v61 = vsel %vm59, %v53, 0
    %v64 = vsel %vm59, %v54, 0
    %66 = vmatpush.msra.mxu0 0.0
    %67 = vmatpush.msra.mxu0 0.0
    %68 = vmatpush.msra.mxu0 0.0
    %69 = vmatpush.msra.mxu0 0.0
    %70 = vmatpush.msra.mxu0 0.0
    %71 = vmatpush.msra.mxu0 0.0
    %72 = vmatpush.msra.mxu0 0.0
    %73 = vmatpush.msra.mxu0 0.0
    %74 = vmatpush.msra.mxu0 0.0
    %75 = vmatpush.msra.mxu0 0.0
    %76 = vmatpush.msra.mxu0 0.0
    %77 = vmatpush.msra.mxu0 0.0
    %78 = vmatpush.msra.mxu0 %v58
    %79 = vmatpush.msra.mxu0 %v57
    %80 = vmatpush.msra.mxu0 %v56
    %81 = vmatpush.msra.mxu0 %v55
    %82 = vmatmul.f32.gmra.mxu0 %v61
    %v83 = vpop.f32.mrf.mxu0
    %v84 = vadd.f32 0.0, %v83
    %85 = vmatmul.f32.gmra.mxu0 %v64
    %v86 = vpop.f32.mrf.mxu0
    %v87 = vadd.f32 0.0, %v86
    %88 = vdwg.mxu0
    %v89 = vadd.f32 %v51, %v84
    %v90 = vadd.f32 %v52, %v87
    %91 = vst.msk [vmem:[#allocation2] sm:$0xff] %vm59, %v89
    %92 = vst.msk [vmem:[#allocation2 + $0x8] sm:$0xff] %vm59, %v90
    // Predicated region
    $region22: #{tpu_custom_call.1} parent=1 // pred_check
      %p93 = pneg %p44
    $region23: #{tpu_custom_call.1} parent=1 // pred_check_branch
      %95 = sbr.rel (%p93) target = $region25
    $region24: #{tpu_custom_call.1} parent=1 // pred_region
      %v96 = vld [vmem:[#allocation2] sm:$0xff]
      %v97 = vld [vmem:[#allocation2 + $0x8] sm:$0xff]
      %98 = vst.msk [vmem:[#allocation8] sm:$0xff] %vm59, %v96
      %99 = vst.msk [vmem:[#allocation8 + $0x8] sm:$0xff] %vm59, %v97
    $region25: #{tpu_custom_call.1} parent=1 // pred_fallthru
      _
    // Predicated region
    $region26: #{tpu_custom_call.1} parent=1 // pred_check
      _
    $region27: #{tpu_custom_call.1} parent=1 // pred_check_branch
      %101 = sbr.rel (0) target = $region29
    $region28: #{tpu_custom_call.1} parent=1 // pred_region
      %103 = vsyncadd [#allocation5], 0
      %s104 = sshll.u32 [#allocation8], 4
      %s105 = int_to_ptr.vmem [resolvable:$true] %s104
      %s106 = sshll.u32 %s2, 4
      %s107 = int_to_ptr.hbm [resolvable:$true] %s106
      %112 = dma.vmem_to_hbm [thread:$0]  %s105, 256, %s107, [#allocation5], 128, 128, 8
    $region29: #{tpu_custom_call.1} parent=1 // pred_fallthru
      _
    // Predicated region
    $region30: #{tpu_custom_call.1} parent=1 // pred_check
      _
    $region31: #{tpu_custom_call.1} parent=1 // pred_check_branch
      %114 = sbr.rel (0) target = $region33
    $region32: #{tpu_custom_call.1} parent=1 // pred_region
      %116 = dma.done [#allocation5], 256
    $region33: #{tpu_custom_call.1} parent=1 // pred_fallthru
      _
    %117 = vsyncpa [#allocation4], 1
    %118 = vsyncpa [#allocation7], 1
    %119 = vsyncpa [#allocation5], 1

</llo_original>
